<compile_context>
chip_gen: v6e
topology: v6e:2x2x1
jax: 0.10.0
libtpu: 0.0.40
codegen_flags: <defaults>
</compile_context>

<pallas_src>
import math

import jax
import jax.numpy as jnp
from jax.experimental import pallas as pl
from jax.experimental.pallas import tpu as pltpu

LANES = 128
TILE_ROWS = 1024      # 1024 * 128 * 4 B = 512 KiB per operand tile
NUM_CORES = 2         # leading "parallel" grid axis (v7x megacore; harmless on v5e/v6e)
HALF_LOG_2PI = 0.5 * math.log(2.0 * math.pi)   # == log(sqrt(2*pi))


def _make_kernel(tile_rows, n_tiles, num_cores, ragged_rows):
    """Kernel closes over static Python ints only (no captured arrays)."""
    last_is_partial = ragged_rows != tile_rows

    def _tile_nll(x_ref, mu_ref, sigma_ref):
        sigma = sigma_ref[...].astype(jnp.float32) + 1e-6
        z = (x_ref[...].astype(jnp.float32) - mu_ref[...].astype(jnp.float32)) / sigma
        # log(sqrt(2*pi)) is folded in analytically by the wrapper.
        return jnp.log(sigma) + 0.5 * (z * z)          # (tile_rows, LANES) f32

    def _accumulate(vals, o_ref):
        t = vals.shape[0]
        if t % 8 == 0:
            # vreg-shaped accumulation: pure VPU adds, no per-tile scalar reduce.
            o_ref[0, :, :] += vals.reshape(t // 8, 8, LANES).sum(axis=0)
        else:
            # tiny / oddly shaped inputs only
            o_ref[0, 0:1, :] += vals.sum(axis=0, keepdims=True)

    def kernel(x_ref, mu_ref, sigma_ref, o_ref):
        c = pl.program_id(0)
        i = pl.program_id(1)
        t = i * num_cores + c          # global row-tile index handled this step

        @pl.when(i == 0)
        def _():
            o_ref[...] = jnp.zeros_like(o_ref)

        @pl.when(t < n_tiles)          # skip the clamped leftover step (odd n_tiles)
        def _():
            if last_is_partial:
                @pl.when(t != n_tiles - 1)
                def _():
                    _accumulate(_tile_nll(x_ref, mu_ref, sigma_ref), o_ref)

                @pl.when(t == n_tiles - 1)
                def _():
                    vals = _tile_nll(x_ref, mu_ref, sigma_ref)
                    row_ids = jax.lax.broadcasted_iota(jnp.int32, vals.shape, 0)
                    vals = jnp.where(row_ids < ragged_rows, vals, 0.0)
                    _accumulate(vals, o_ref)
            else:
                _accumulate(_tile_nll(x_ref, mu_ref, sigma_ref), o_ref)

    return kernel


def normal_distribution_loss(x, mu, sigma):
    """Pallas implementation of NormalDistributionLoss.forward -> scalar f32 NLL."""
    x = jnp.asarray(x).reshape(-1)
    mu = jnp.asarray(mu).reshape(-1)
    sigma = jnp.asarray(sigma).reshape(-1)
    total_n = x.shape[0]

    n_main = (total_n // LANES) * LANES      # lane-aligned prefix handled by Pallas
    total_sum = jnp.zeros((), jnp.float32)

    if n_main > 0:
        rows = n_main // LANES
        if n_main == total_n:
            # pure reshape of the flat arrays -> no HBM copy
            x2 = x.reshape(rows, LANES)
            mu2 = mu.reshape(rows, LANES)
            s2 = sigma.reshape(rows, LANES)
        else:
            # TODO(synk): the prefix slice materializes a copy for non-128-aligned
            # element counts; aligned inputs (the common case) take the copy-free path.
            x2 = x[:n_main].reshape(rows, LANES)
            mu2 = mu[:n_main].reshape(rows, LANES)
            s2 = sigma[:n_main].reshape(rows, LANES)

        tile_rows = min(TILE_ROWS, rows)          # full-dim block if array is small
        n_tiles = pl.cdiv(rows, tile_rows)
        num_cores = min(NUM_CORES, n_tiles)
        tiles_per_core = pl.cdiv(n_tiles, num_cores)
        ragged_rows = rows - (n_tiles - 1) * tile_rows

        kernel = _make_kernel(tile_rows, n_tiles, num_cores, ragged_rows)

        def in_map(c, i):
            t = i * num_cores + c
            return (jnp.minimum(t, n_tiles - 1), 0)

        in_spec = pl.BlockSpec((tile_rows, LANES), in_map)

        in_bytes = n_main * (x2.dtype.itemsize + mu2.dtype.itemsize + s2.dtype.itemsize)
        cost = pl.CostEstimate(
            flops=6 * n_main,
            transcendentals=2 * n_main,
            bytes_accessed=in_bytes + num_cores * 8 * LANES * 4,
        )

        partials = pl.pallas_call(
            kernel,
            out_shape=jax.ShapeDtypeStruct((num_cores, 8, LANES), jnp.float32),
            grid_spec=pltpu.PrefetchScalarGridSpec(
                num_scalar_prefetch=0,
                grid=(num_cores, tiles_per_core),
                in_specs=[in_spec, in_spec, in_spec],
                out_specs=pl.BlockSpec((1, 8, LANES), lambda c, i: (c, 0, 0)),
            ),
            compiler_params=pltpu.CompilerParams(
                dimension_semantics=("parallel", "arbitrary"),
                vmem_limit_bytes=32 * 1024 * 1024,
            ),
            cost_estimate=cost,
        )(x2, mu2, s2)
        total_sum = total_sum + jnp.sum(partials)

    if total_n > n_main:
        # < 128 leftover elements: plain jnp, negligible cost.
        x_t = x[n_main:].astype(jnp.float32)
        mu_t = mu[n_main:].astype(jnp.float32)
        s_t = sigma[n_main:].astype(jnp.float32) + 1e-6
        z_t = (x_t - mu_t) / s_t
        total_sum = total_sum + jnp.sum(jnp.log(s_t) + 0.5 * z_t * z_t)

    # log(sqrt(2*pi)) contributes exactly HALF_LOG_2PI to the mean.
    return (total_sum / total_n + HALF_LOG_2PI).astype(jnp.float32)


def _reference(x, mu, sigma):
    sigma = sigma + 1e-6
    term1 = jnp.log(sigma * jnp.sqrt(jnp.asarray(2.0 * math.pi, jnp.float32)))
    term2 = 0.5 * ((x - mu) / sigma) ** 2
    return jnp.mean(term1 + term2)


if __name__ == "__main__":
    key = jax.random.PRNGKey(0)
    kx, kmu, ksig = jax.random.split(key, 3)

    # Small example shapes: batch=2, channels=4, spatial=16x16 (NCHW-style).
    shape = (2, 4, 16, 16)
    x = jax.random.normal(kx, shape, dtype=jnp.float32)
    mu = jax.random.normal(kmu, shape, dtype=jnp.float32)
    # sigma must be positive (std-dev); use uniform in (0.1, 1.1).
    sigma = jax.random.uniform(ksig, shape, dtype=jnp.float32, minval=0.1, maxval=1.1)

    nll = normal_distribution_loss(x, mu, sigma)
    jax.block_until_ready(nll)

    ref = _reference(x, mu, sigma)
    assert jnp.allclose(nll, ref, rtol=1e-5, atol=1e-5), (nll, ref)

    print("KERNEL_OK")
</pallas_src>

<mosaic_0001>
module attributes {stable_mosaic.version = 11 : i64} {
  func.func @kernel(%arg0: i32, %arg1: i32, %arg2: memref<16x128xf32, #tpu.memory_space<vmem>>, %arg3: memref<16x128xf32, #tpu.memory_space<vmem>>, %arg4: memref<16x128xf32, #tpu.memory_space<vmem>>, %arg5: memref<1x8x128xf32, #tpu.memory_space<vmem>>) attributes {dimension_semantics = [#tpu.dimension_semantics<parallel>, #tpu.dimension_semantics<arbitrary>], iteration_bounds = array<i64: 1, 1>, scalar_prefetch = 0 : i64, scratch_operands = 0 : i64, tpu.core_type = #tpu.core_type<tc>, window_params = [{transform_indices = @transform_0, window_bounds = array<i64: 16, 128>}, {transform_indices = @transform_1, window_bounds = array<i64: 16, 128>}, {transform_indices = @transform_2, window_bounds = array<i64: 16, 128>}, {transform_indices = @transform_3, window_bounds = array<i64: 1, 8, 128>}]} {
    %c1_i32 = arith.constant 1 : i32
    %0 = arith.muli %arg1, %c1_i32 : i32
    %1 = arith.addi %0, %arg0 : i32
    %c0_i32 = arith.constant 0 : i32
    %2 = arith.cmpi eq, %arg1, %c0_i32 : i32
    %3 = arith.extui %2 : i1 to i32
    %c0_i32_0 = arith.constant 0 : i32
    %4 = arith.cmpi ne, %3, %c0_i32_0 : i32
    scf.if %4 {
      %cst = arith.constant 0.000000e+00 : f32
      %8 = vector.broadcast %cst : f32 to vector<1x8x128xf32>
      %c0 = arith.constant 0 : index
      %c0_3 = arith.constant 0 : index
      %c0_4 = arith.constant 0 : index
      %9 = vector.load %arg5[%c0, %c0_3, %c0_4] : memref<1x8x128xf32, #tpu.memory_space<vmem>>, vector<1x8x128xf32>
      tpu.vector_store %arg5[%c0, %c0_3, %c0_4], %8 {strides = array<i32>} : memref<1x8x128xf32, #tpu.memory_space<vmem>>, vector<1x8x128xf32>,
    } else {
    }
    %c1_i32_1 = arith.constant 1 : i32
    %5 = arith.cmpi slt, %1, %c1_i32_1 : i32
    %6 = arith.extui %5 : i1 to i32
    %c0_i32_2 = arith.constant 0 : i32
    %7 = arith.cmpi ne, %6, %c0_i32_2 : i32
    scf.if %7 {
      %c0 = arith.constant 0 : index
      %c0_3 = arith.constant 0 : index
      %8 = vector.load %arg4[%c0, %c0_3] : memref<16x128xf32, #tpu.memory_space<vmem>>, vector<16x128xf32>
      %cst = arith.constant 9.99999997E-7 : f32
      %9 = vector.broadcast %cst : f32 to vector<16x128xf32>
      %10 = arith.addf %8, %9 : vector<16x128xf32>
      %c0_4 = arith.constant 0 : index
      %c0_5 = arith.constant 0 : index
      %11 = vector.load %arg2[%c0_4, %c0_5] : memref<16x128xf32, #tpu.memory_space<vmem>>, vector<16x128xf32>
      %c0_6 = arith.constant 0 : index
      %c0_7 = arith.constant 0 : index
      %12 = vector.load %arg3[%c0_6, %c0_7] : memref<16x128xf32, #tpu.memory_space<vmem>>, vector<16x128xf32>
      %13 = arith.subf %11, %12 : vector<16x128xf32>
      %14 = arith.divf %13, %10 : vector<16x128xf32>
      %15 = math.log %10 : vector<16x128xf32>
      %16 = arith.mulf %14, %14 : vector<16x128xf32>
      %cst_8 = arith.constant 5.000000e-01 : f32
      %17 = vector.broadcast %cst_8 : f32 to vector<16x128xf32>
      %18 = arith.mulf %17, %16 : vector<16x128xf32>
      %19 = arith.addf %15, %18 : vector<16x128xf32>
      %c0_9 = arith.constant 0 : index
      %c0_10 = arith.constant 0 : index
      %c0_11 = arith.constant 0 : index
      %20 = vector.load %arg5[%c0_9, %c0_10, %c0_11] : memref<1x8x128xf32, #tpu.memory_space<vmem>>, vector<1x8x128xf32>
      %21 = vector.shape_cast %20 : vector<1x8x128xf32> to vector<8x128xf32>
      %22 = vector.shape_cast %19 : vector<16x128xf32> to vector<2x8x128xf32>
      %cst_12 = arith.constant dense<0.000000e+00> : vector<8x128xf32>
      %23 = vector.multi_reduction <add>, %22, %cst_12 [0] : vector<2x8x128xf32> to vector<8x128xf32>
      %24 = arith.addf %21, %23 : vector<8x128xf32>
      %c0_13 = arith.constant 0 : index
      %c0_14 = arith.constant 0 : index
      %c0_15 = arith.constant 0 : index
      %25 = vector.load %arg5[%c0_13, %c0_14, %c0_15] : memref<1x8x128xf32, #tpu.memory_space<vmem>>, vector<1x8x128xf32>
      %26 = vector.shape_cast %25 : vector<1x8x128xf32> to vector<8x128xf32>
      %27 = vector.shape_cast %24 : vector<8x128xf32> to vector<1x8x128xf32>
      tpu.vector_store %arg5[%c0_13, %c0_14, %c0_15], %27 {strides = array<i32>} : memref<1x8x128xf32, #tpu.memory_space<vmem>>, vector<1x8x128xf32>,
    } else {
    }
    return
  }
  func.func @transform_0(%arg0: i32, %arg1: i32) -> (i32, i32) {
    %c1_i32 = arith.constant 1 : i32
    %0 = arith.muli %arg1, %c1_i32 : i32
    %1 = arith.addi %0, %arg0 : i32
    %c0_i32 = arith.constant 0 : i32
    %2 = arith.minsi %1, %c0_i32 : i32
    %c0_i32_0 = arith.constant 0 : i32
    %c0_i32_1 = arith.constant 0 : i32
    return %2, %c0_i32_0 : i32, i32
  }
  func.func @transform_1(%arg0: i32, %arg1: i32) -> (i32, i32) {
    %c1_i32 = arith.constant 1 : i32
    %0 = arith.muli %arg1, %c1_i32 : i32
    %1 = arith.addi %0, %arg0 : i32
    %c0_i32 = arith.constant 0 : i32
    %2 = arith.minsi %1, %c0_i32 : i32
    %c0_i32_0 = arith.constant 0 : i32
    %c0_i32_1 = arith.constant 0 : i32
    return %2, %c0_i32_0 : i32, i32
  }
  func.func @transform_2(%arg0: i32, %arg1: i32) -> (i32, i32) {
    %c1_i32 = arith.constant 1 : i32
    %0 = arith.muli %arg1, %c1_i32 : i32
    %1 = arith.addi %0, %arg0 : i32
    %c0_i32 = arith.constant 0 : i32
    %2 = arith.minsi %1, %c0_i32 : i32
    %c0_i32_0 = arith.constant 0 : i32
    %c0_i32_1 = arith.constant 0 : i32
    return %2, %c0_i32_0 : i32, i32
  }
  func.func @transform_3(%arg0: i32, %arg1: i32) -> (i32, i32, i32) {
    %c0_i32 = arith.constant 0 : i32
    %c0_i32_0 = arith.constant 0 : i32
    %c0_i32_1 = arith.constant 0 : i32
    return %arg0, %c0_i32, %c0_i32_0 : i32, i32, i32
  }
}

</mosaic_0001>

<llo_original>
// kernel: tpu_custom_call.1
$region0: #{tpu_custom_call.1}
  #allocation0 [shape = 'u32[]', space=smem, size = 0x4, offset = 0x4, fixed_abs, tag = 'smem constant byte address 0x4 - core index']
  #allocation1 [shape = 'u32[144,128]{1,0:T(1,128)}', space=vmem, size = 0x12000, scoped, tag = 'internal scratch']
  %s0 = inlined_call_operand.hbm [shape: f32[16,128], index: 0, kind: input, shape index: {}]
  %s1 = inlined_call_operand.hbm [shape: f32[16,128], index: 1, kind: input, shape index: {}]
  %s2 = inlined_call_operand.hbm [shape: f32[16,128], index: 2, kind: input, shape index: {}]
  %s3 = inlined_call_operand.hbm [shape: f32[1,8,128], index: 3, kind: output, shape index: {}]
  %s4 = sld [smem:[#allocation0]]
  $region42: #{tpu_custom_call.1} parent=0
    _
  %s6 = ssub.s32 1, %s4
  %s7 = scalar_select 0, %s6, %s4
  $region1: #{tpu_custom_call.1} parent=0
    #allocation2 [shape = 'u8[8192]{0}', space=vmem, size = 0x2000, scoped, tag = 'input window, operand 0, single buffered']
    #allocation3 [shape = 's32[1]{0}', space=sflag, size = 0x4, scoped, tag = 'scoped memory for tpu_custom_call.1']
    #allocation4 [shape = 's32[1]{0}', space=sflag, size = 0x4, scoped, tag = 'scoped memory for tpu_custom_call.1']
    #allocation5 [shape = 'u8[8192]{0}', space=vmem, size = 0x2000, scoped, tag = 'input window, operand 1, single buffered']
    #allocation6 [shape = 's32[1]{0}', space=sflag, size = 0x4, scoped, tag = 'scoped memory for tpu_custom_call.1']
    #allocation7 [shape = 'u8[8192]{0}', space=vmem, size = 0x2000, scoped, tag = 'input window, operand 2, single buffered']
    #allocation8 [shape = 'u8[4096]{0}', space=vmem, size = 0x1000, scoped, tag = 'output window, operand 0, single buffered']
    %8 = vsyncpa [#allocation3], 0
    %9 = vsyncpa [#allocation6], 0
    %10 = vsyncpa [#allocation4], 0
    // Predicated region
    $region2: #{tpu_custom_call.1} parent=1 // pred_check
      _
    $region3: #{tpu_custom_call.1} parent=1 // pred_check_branch
      %12 = sbr.rel (0) target = $region5
    $region4: #{tpu_custom_call.1} parent=1 // pred_region
      %s13 = sadd.s32 0, 0
      %p14 = scmp.lt.s32.totalorder %s13, 0
      %s15 = scalar_select %p14, %s13, 0
      %s16 = smul.u32 2, %s15
      %s18 = ssub.s32 256, 256
      %19 = vsyncadd [#allocation3], %s18
      %s20 = smul.addr %s16, 128
      %s21 = scalar_lea.hbm %s0, %s20
      %s22 = sshll.u32 [#allocation2], 4
      %s23 = int_to_ptr.vmem [resolvable:$true] %s22
      %28 = dma.hbm_to_vmem [thread:$0]  %s21, 256, %s23, [#allocation3], 128, 128, 8
    $region5: #{tpu_custom_call.1} parent=1 // pred_fallthru
      _
    // Predicated region
    $region6: #{tpu_custom_call.1} parent=1 // pred_check
      _
    $region7: #{tpu_custom_call.1} parent=1 // pred_check_branch
      %30 = sbr.rel (0) target = $region9
    $region8: #{tpu_custom_call.1} parent=1 // pred_region
      %s31 = sadd.s32 0, 0
      %p32 = scmp.lt.s32.totalorder %s31, 0
      %s33 = scalar_select %p32, %s31, 0
      %s34 = smul.u32 2, %s33
      %s36 = ssub.s32 256, 256
      %37 = vsyncadd [#allocation6], %s36
      %s38 = smul.addr %s34, 128
      %s39 = scalar_lea.hbm %s1, %s38
      %s40 = sshll.u32 [#allocation5], 4
      %s41 = int_to_ptr.vmem [resolvable:$true] %s40
      %46 = dma.hbm_to_vmem [thread:$0]  %s39, 256, %s41, [#allocation6], 128, 128, 8
    $region9: #{tpu_custom_call.1} parent=1 // pred_fallthru
      _
    // Predicated region
    $region10: #{tpu_custom_call.1} parent=1 // pred_check
      _
    $region11: #{tpu_custom_call.1} parent=1 // pred_check_branch
      %48 = sbr.rel (0) target = $region13
    $region12: #{tpu_custom_call.1} parent=1 // pred_region
      %s49 = sadd.s32 0, 0
      %p50 = scmp.lt.s32.totalorder %s49, 0
      %s51 = scalar_select %p50, %s49, 0
      %s52 = smul.u32 2, %s51
      %s54 = ssub.s32 256, 256
      %55 = vsyncadd [#allocation6], %s54
      %s56 = smul.addr %s52, 128
      %s57 = scalar_lea.hbm %s2, %s56
      %s58 = sshll.u32 [#allocation7], 4
      %s59 = int_to_ptr.vmem [resolvable:$true] %s58
      %64 = dma.hbm_to_vmem [thread:$0]  %s57, 256, %s59, [#allocation6], 128, 128, 8
    $region13: #{tpu_custom_call.1} parent=1 // pred_fallthru
      _
    // Predicated region
    $region14: #{tpu_custom_call.1} parent=1 // pred_check
      _
    $region15: #{tpu_custom_call.1} parent=1 // pred_check_branch
      %66 = sbr.rel (0) target = $region17
    $region16: #{tpu_custom_call.1} parent=1 // pred_region
      %67 = dma.done [#allocation3], 256
    $region17: #{tpu_custom_call.1} parent=1 // pred_fallthru
      _
    // Predicated region
    $region18: #{tpu_custom_call.1} parent=1 // pred_check
      _
    $region19: #{tpu_custom_call.1} parent=1 // pred_check_branch
      %69 = sbr.rel (0) target = $region21
    $region20: #{tpu_custom_call.1} parent=1 // pred_region
      %70 = dma.done [#allocation6], 256
    $region21: #{tpu_custom_call.1} parent=1 // pred_fallthru
      _
    // Predicated region
    $region22: #{tpu_custom_call.1} parent=1 // pred_check
      _
    $region23: #{tpu_custom_call.1} parent=1 // pred_check_branch
      %72 = sbr.rel (0) target = $region25
    $region24: #{tpu_custom_call.1} parent=1 // pred_region
      %73 = dma.done [#allocation6], 256
    $region25: #{tpu_custom_call.1} parent=1 // pred_fallthru
      _
    %s74 = sadd.s32 0, 0
    %p75 = scmp.lt.s32.totalorder %s74, 0
    %s76 = scalar_select %p75, %s74, 0
    %s77 = smul.u32 2, %s76
    %s78 = sadd.s32 0, 0
    %p79 = scmp.lt.s32.totalorder %s78, 0
    %s80 = scalar_select %p79, %s78, 0
    %s81 = smul.u32 2, %s80
    %s82 = sadd.s32 0, 0
    %p83 = scmp.lt.s32.totalorder %s82, 0
    %s84 = scalar_select %p83, %s82, 0
    %s85 = smul.u32 2, %s84
    %s86 = sadd.s32 0, 0
    %p87 = scmp.eq.s32.totalorder 0, 0
    // Predicated region
    $region26: #{tpu_custom_call.1} parent=1 // pred_check
      %p88 = pneg %p87
    $region27: #{tpu_custom_call.1} parent=1 // pred_check_branch
      %90 = sbr.rel (%p88) target = $region29
    $region28: #{tpu_custom_call.1} parent=1 // pred_region
      %91 = vst [vmem:[#allocation8] sm:$0xff] 0.0
    $region29: #{tpu_custom_call.1} parent=1 // pred_fallthru
      _
    %p92 = scmp.lt.s32.totalorder %s86, 1
    // Predicated region
    $region30: #{tpu_custom_call.1} parent=1 // pred_check
      %p93 = pneg %p92
    $region31: #{tpu_custom_call.1} parent=1 // pred_check_branch
      %95 = sbr.rel (%p93) target = $region33
    $region32: #{tpu_custom_call.1} parent=1 // pred_region
      %v96 = vld [vmem:[#allocation7] sm:$0xff]
      %v97 = vld [vmem:[#allocation7 + $0x8] sm:$0xff]
      %v98 = vadd.f32 %v96, 1e-06
      %v99 = vadd.f32 %v97, 1e-06
      %v100 = vld [vmem:[#allocation2] sm:$0xff]
      %v101 = vld [vmem:[#allocation2 + $0x8] sm:$0xff]
      %v102 = vld [vmem:[#allocation5] sm:$0xff]
      %v103 = vld [vmem:[#allocation5 + $0x8] sm:$0xff]
      %v104 = vsub.f32 %v100, %v102
      %v105 = vsub.f32 %v101, %v103
      %v106 = vrcp.pop %v98
      %v107 = vmul.f32 %v104, %v106
      %v108 = vrcp.pop %v99
      %v109 = vmul.f32 %v105, %v108
      %v110 = vlog2.pop %v98
      %v111 = vmul.f32 %v110, 0.6931472
      %v112 = vlog2.pop %v99
      %v113 = vmul.f32 %v112, 0.6931472
      %v114 = vmul.f32 %v107, %v107
      %v115 = vmul.f32 %v109, %v109
      %v116 = vmul.f32 %v114, 0.5
      %v117 = vmul.f32 %v115, 0.5
      %v118 = vadd.f32 %v111, %v116
      %v119 = vadd.f32 %v113, %v117
      %v120 = vld [vmem:[#allocation8] sm:$0xff]
      %v121 = vadd.f32 %v118, %v119
      %v122 = vadd.f32 %v120, %v121
      %123 = vst [vmem:[#allocation8] sm:$0xff] %v122
    $region33: #{tpu_custom_call.1} parent=1 // pred_fallthru
      _
    // Predicated region
    $region34: #{tpu_custom_call.1} parent=1 // pred_check
      _
    $region35: #{tpu_custom_call.1} parent=1 // pred_check_branch
      %125 = sbr.rel (0) target = $region37
    $region36: #{tpu_custom_call.1} parent=1 // pred_region
      %s127 = ssub.s32 128, 128
      %128 = vsyncadd [#allocation4], %s127
      %s130 = sshll.u32 [#allocation8], 4
      %s131 = int_to_ptr.vmem [resolvable:$true] %s130
      %133 = dma.vmem_to_hbm [thread:$0]  %s131, 128, %s3, [#allocation4]
    $region37: #{tpu_custom_call.1} parent=1 // pred_fallthru
      _
    // Predicated region
    $region38: #{tpu_custom_call.1} parent=1 // pred_check
      _
    $region39: #{tpu_custom_call.1} parent=1 // pred_check_branch
      %135 = sbr.rel (0) target = $region41
    $region40: #{tpu_custom_call.1} parent=1 // pred_region
      %136 = dma.done [#allocation4], 128
    $region41: #{tpu_custom_call.1} parent=1 // pred_fallthru
      _
    %137 = vsyncpa [#allocation3], 1
    %138 = vsyncpa [#allocation6], 1
    %139 = vsyncpa [#allocation4], 1

</llo_original>
